<compile_context>
chip_gen: v5e
topology: v5e:2x2
jax: 0.10.0
libtpu: 0.0.40
codegen_flags: <defaults>
</compile_context>

<pallas_src>
import jax
import jax.numpy as jnp
from jax.experimental import pallas as pl
from jax.experimental.pallas import tpu as pltpu


def _scale_kernel(w_ref, o_ref):
    # Elementwise hot path on the full lane-dense slab: out = 400 * weighting.
    o_ref[...] = 400.0 * w_ref[...]


def layer_weights_forward(weighting: jax.Array, x: jax.Array | None = None) -> jax.Array:
    """Reproduces LayerWeights.forward: returns 400 * weighting (x is unused)."""
    n_weights = weighting.shape[0]
    # Embed the parameter in a lane-dense (1, multiple-of-128) slab.
    lanes = pl.cdiv(n_weights, 128) * 128
    w2d = jnp.pad(weighting, (0, lanes - n_weights)).reshape(1, lanes)

    out2d = pl.pallas_call(
        _scale_kernel,
        out_shape=jax.ShapeDtypeStruct((1, lanes), weighting.dtype),
        # Untiled: the whole (tiny) array lives in VMEM for the single
        # invocation; no grid, no pipelining machinery.
        in_specs=[pl.BlockSpec(memory_space=pltpu.VMEM)],
        out_specs=pl.BlockSpec(memory_space=pltpu.VMEM),
    )(w2d)

    return out2d[0, :n_weights]


if __name__ == "__main__":
    key = jax.random.PRNGKey(0)
    n_weights = 32

    # nn.Parameter(torch.zeros(n_weights)) -> canonical init is zeros.
    weighting_zeros = jnp.zeros((n_weights,), dtype=jnp.float32)
    # Random perturbation to exercise the kernel non-trivially.
    weighting_rand = jax.random.normal(key, (n_weights,), dtype=jnp.float32)

    # Dummy x (ignored by forward), consistent with the module call signature.
    x = jax.random.normal(jax.random.PRNGKey(1), (2, 4, 16, 16), dtype=jnp.float32)

    out_zeros = jax.block_until_ready(layer_weights_forward(weighting_zeros, x))
    out_rand = jax.block_until_ready(layer_weights_forward(weighting_rand, x))

    assert out_zeros.shape == (n_weights,)
    assert out_rand.shape == (n_weights,)
    assert jnp.allclose(out_zeros, jnp.zeros((n_weights,), dtype=jnp.float32))
    assert jnp.allclose(out_rand, 400.0 * weighting_rand, rtol=1e-6, atol=1e-6)

    print("KERNEL_OK")
</pallas_src>

<mosaic_0001>
module attributes {stable_mosaic.version = 11 : i64} {
  func.func @_scale_kernel(%arg0: memref<1x128xf32, #tpu.memory_space<vmem>>, %arg1: memref<1x128xf32, #tpu.memory_space<vmem>>) attributes {dimension_semantics = [], scalar_prefetch = 0 : i64, scratch_operands = 0 : i64, tpu.core_type = #tpu.core_type<tc>} {
    %c0 = arith.constant 0 : index
    %c0_0 = arith.constant 0 : index
    %0 = vector.load %arg0[%c0, %c0_0] : memref<1x128xf32, #tpu.memory_space<vmem>>, vector<1x128xf32>
    %cst = arith.constant 4.000000e+02 : f32
    %1 = vector.broadcast %cst : f32 to vector<1x128xf32>
    %2 = arith.mulf %1, %0 : vector<1x128xf32>
    %c0_1 = arith.constant 0 : index
    %c0_2 = arith.constant 0 : index
    %3 = vector.load %arg1[%c0_1, %c0_2] : memref<1x128xf32, #tpu.memory_space<vmem>>, vector<1x128xf32>
    tpu.vector_store %arg1[%c0_1, %c0_2], %2 {strides = array<i32>} : memref<1x128xf32, #tpu.memory_space<vmem>>, vector<1x128xf32>,
    return
  }
}

</mosaic_0001>

<llo_original>
// kernel: tpu_custom_call.1
$region0: #{tpu_custom_call.1}
  #allocation0 [shape = 'u32[]', space=smem, size = 0x4, offset = 0x4, fixed_abs, tag = 'smem constant byte address 0x4 - core index']
  #allocation1 [shape = 'u32[72,128]{1,0:T(1,128)}', space=vmem, size = 0x9000, scoped, tag = 'internal scratch']
  %s0 = inlined_call_operand.hbm [shape: f32[1,128], index: 0, kind: input, shape index: {}]
  %s1 = inlined_call_operand.hbm [shape: f32[1,128], index: 1, kind: output, shape index: {}]
  %s2 = sld [smem:[#allocation0]]
  $region18: #{tpu_custom_call.1} parent=0
    _
  %s4 = ssub.s32 1, %s2
  %s5 = scalar_select 0, %s4, %s2
  $region1: #{tpu_custom_call.1} parent=0
    #allocation2 [shape = 'u8[512]{0}', space=vmem, size = 0x400, scoped, tag = 'input window, operand 0, single buffered']
    #allocation3 [shape = 's32[1]{0}', space=sflag, size = 0x4, scoped, tag = 'scoped memory for tpu_custom_call.1']
    #allocation4 [shape = 's32[1]{0}', space=sflag, size = 0x4, scoped, tag = 'scoped memory for tpu_custom_call.1']
    #allocation5 [shape = 'u8[512]{0}', space=vmem, size = 0x400, scoped, tag = 'output window, operand 0, single buffered']
    %6 = vsyncpa [#allocation3], 0
    %7 = vsyncpa [#allocation4], 0
    // Predicated region
    $region2: #{tpu_custom_call.1} parent=1 // pred_check
      _
    $region3: #{tpu_custom_call.1} parent=1 // pred_check_branch
      %9 = sbr.rel (0) target = $region5
    $region4: #{tpu_custom_call.1} parent=1 // pred_region
      %11 = vsyncadd [#allocation3], 0
      %s13 = sshll.u32 %s0, 4
      %s14 = int_to_ptr.hbm [resolvable:$true] %s13
      %s15 = sshll.u32 [#allocation2], 4
      %s16 = int_to_ptr.vmem [resolvable:$true] %s15
      %18 = dma.hbm_to_vmem [thread:$0]  %s14, 16, %s16, [#allocation3]
    $region5: #{tpu_custom_call.1} parent=1 // pred_fallthru
      _
    // Predicated region
    $region6: #{tpu_custom_call.1} parent=1 // pred_check
      _
    $region7: #{tpu_custom_call.1} parent=1 // pred_check_branch
      %20 = sbr.rel (0) target = $region9
    $region8: #{tpu_custom_call.1} parent=1 // pred_region
      %22 = dma.done [#allocation3], 16
    $region9: #{tpu_custom_call.1} parent=1 // pred_fallthru
      _
    %v23 = vld [vmem:[#allocation2] sm:$0x1]
    %v24 = vmul.f32 %v23, 400.0
    %25 = vst [vmem:[#allocation5] sm:$0x1] %v24
    // Predicated region
    $region10: #{tpu_custom_call.1} parent=1 // pred_check
      _
    $region11: #{tpu_custom_call.1} parent=1 // pred_check_branch
      %27 = sbr.rel (0) target = $region13
    $region12: #{tpu_custom_call.1} parent=1 // pred_region
      %29 = vsyncadd [#allocation4], 0
      %s31 = sshll.u32 [#allocation5], 4
      %s32 = int_to_ptr.vmem [resolvable:$true] %s31
      %s33 = sshll.u32 %s1, 4
      %s34 = int_to_ptr.hbm [resolvable:$true] %s33
      %36 = dma.vmem_to_hbm [thread:$0]  %s32, 16, %s34, [#allocation4]
    $region13: #{tpu_custom_call.1} parent=1 // pred_fallthru
      _
    // Predicated region
    $region14: #{tpu_custom_call.1} parent=1 // pred_check
      _
    $region15: #{tpu_custom_call.1} parent=1 // pred_check_branch
      %38 = sbr.rel (0) target = $region17
    $region16: #{tpu_custom_call.1} parent=1 // pred_region
      %40 = dma.done [#allocation4], 16
    $region17: #{tpu_custom_call.1} parent=1 // pred_fallthru
      _
    %41 = vsyncpa [#allocation3], 1
    %42 = vsyncpa [#allocation4], 1

</llo_original>
